<compile_context>
chip_gen: v5e
topology: v5e:2x2
jax: 0.10.0
libtpu: 0.0.40
codegen_flags: <defaults>
</compile_context>

<pallas_src>
import numpy as np
import jax
import jax.numpy as jnp
from jax.experimental import pallas as pl
from jax.experimental.pallas import tpu as pltpu


# Constant map from the 16 logic-op weights to affine coefficients over
# [1, a, b, a*b].  Row i corresponds to LogicLayer.bin_op(a, b, i).
_OP_COEFFS = np.array(
    [
        [0.0,  0.0,  0.0,  0.0],   # 0 : 0
        [0.0,  0.0,  0.0,  1.0],   # 1 : a*b
        [0.0,  1.0,  0.0, -1.0],   # 2 : a - a*b
        [0.0,  1.0,  0.0,  0.0],   # 3 : a
        [0.0,  0.0,  1.0, -1.0],   # 4 : b - a*b
        [0.0,  0.0,  1.0,  0.0],   # 5 : b
        [0.0,  1.0,  1.0, -2.0],   # 6 : a + b - 2ab
        [0.0,  1.0,  1.0, -1.0],   # 7 : a + b - ab
        [1.0, -1.0, -1.0,  1.0],   # 8 : 1 - (a + b - ab)
        [1.0, -1.0, -1.0,  2.0],   # 9 : 1 - (a + b - 2ab)
        [1.0,  0.0, -1.0,  0.0],   # 10: 1 - b
        [1.0,  0.0, -1.0,  1.0],   # 11: 1 - b + ab
        [1.0, -1.0,  0.0,  0.0],   # 12: 1 - a
        [1.0, -1.0,  0.0,  1.0],   # 13: 1 - a + ab
        [1.0,  0.0,  0.0, -1.0],   # 14: 1 - ab
        [1.0,  0.0,  0.0,  0.0],   # 15: 1
    ],
    dtype=np.float32,
)


def _round_up(x, m):
    return (x + m - 1) // m * m


def _vmem_capacity_bytes():
    """Best-effort VMEM capacity query; conservative fallback (v7x per-core)."""
    try:
        return int(getattr(pltpu.get_tpu_info(), "vmem_capacity_bytes"))
    except Exception:
        return 64 * 1024 * 1024


def _pick_tiles(batch, out_dim, tb_cap, tn_cap):
    """Tile sizes obeying the (8,128) rule without any wrapper-side padding.

    Each block dim is either the full array dim or an aligned cap (ragged last
    block handled by Pallas masking).  Also keeps >= 2 parallel grid steps when
    possible so v7x's two TensorCores both get work.
    """
    tb = batch if batch <= tb_cap else tb_cap
    tn = out_dim if out_dim <= tn_cap else tn_cap
    if pl.cdiv(batch, tb) * pl.cdiv(out_dim, tn) < 2:
        if out_dim > 128:
            tn = _round_up(pl.cdiv(out_dim, 2), 128)
        elif batch > 8:
            tb = _round_up(pl.cdiv(batch, 2), 8)
    return tb, tn


def _logic_affine_kernel(a_ref, b_ref, c_ref, o_ref):
    """out = c0 + c1*a + c2*b + c3*(a*b), Horner form, coeffs broadcast over rows.

    a_ref, b_ref, o_ref : (tb, tn)
    c_ref               : (8, tn) f32, rows 0..3 = [const, a, b, ab] coefficients.
    """
    a = a_ref[...].astype(jnp.float32)
    b = b_ref[...].astype(jnp.float32)
    c0 = c_ref[0:1, :]
    c1 = c_ref[1:2, :]
    c2 = c_ref[2:3, :]
    c3 = c_ref[3:4, :]
    o_ref[...] = (c0 + b * c2 + a * (c1 + b * c3)).astype(o_ref.dtype)


def _logic_gather_kernel(x_ref, idx_ref, c_ref, o_ref):
    """Fused gather + logic-op evaluation (small fan-in path).

    x_ref   : (tb, in_dim)  resident batch-row tile (block index constant over j)
    idx_ref : (8, tn) int32, rows 0/1 = idx0/idx1 (rest padding)
    c_ref   : (8, tn) f32,   rows 0..3 = [const, a, b, ab] coefficients
    o_ref   : (tb, tn)

    The gather x[:, idx] is realised as a one-hot matmul on the (otherwise idle)
    MXU: onehot[k, n] = (k == idx[n]).  Each column has exactly one non-zero, so
    the f32-accumulated dot selects values exactly.  Garbage idx values in
    ragged edge lanes only pollute lanes whose output writes are masked and
    never cause OOB memory accesses (selection is a compare, not an address).
    """
    x = x_ref[...]
    in_dim = x_ref.shape[1]
    tn = o_ref.shape[1]
    k = jax.lax.broadcasted_iota(jnp.int32, (in_dim, tn), 0)
    sel0 = jnp.where(k == idx_ref[0:1, :], 1.0, 0.0).astype(x.dtype)
    sel1 = jnp.where(k == idx_ref[1:2, :], 1.0, 0.0).astype(x.dtype)
    a = jnp.dot(x, sel0, preferred_element_type=jnp.float32)   # (tb, tn) f32
    b = jnp.dot(x, sel1, preferred_element_type=jnp.float32)   # (tb, tn) f32
    c0 = c_ref[0:1, :]
    c1 = c_ref[1:2, :]
    c2 = c_ref[2:3, :]
    c3 = c_ref[3:4, :]
    o_ref[...] = (c0 + b * c2 + a * (c1 + b * c3)).astype(o_ref.dtype)


def logic_layer_forward(x, weights, idx0, idx1, training=True, fuse_gather=None):
    """Pallas-backed LogicLayer.forward.

    x       : (B, in_dim)  float32 or bfloat16 (bf16 halves HBM traffic)
    weights : (out_dim, 16)
    idx0/1  : (out_dim,) integer indices into in_dim
    """
    B, in_dim = x.shape
    out_dim = weights.shape[0]
    out_dtype = x.dtype   # output dtype follows the activation dtype

    # --- glue (plain JAX): per-gate op distribution -> 4 affine coefficients ---
    if training:
        ind = jax.nn.softmax(weights.astype(jnp.float32), axis=-1)       # (out_dim, 16)
    else:
        ind = jax.nn.one_hot(jnp.argmax(weights, axis=-1), 16,
                             dtype=jnp.float32)                          # (out_dim, 16)
    coeffs = (ind @ jnp.asarray(_OP_COEFFS)).T                           # (4, out_dim)
    coeffs = jnp.pad(coeffs, ((0, 4), (0, 0)))                           # (8, out_dim)

    idx0 = idx0.astype(jnp.int32)
    idx1 = idx1.astype(jnp.int32)

    if fuse_gather is None:
        # The one-hot MXU gather is O(B*in_dim*out_dim) MACs; it beats the HBM
        # roofline of the unfused path (which re-reads materialised a/b from HBM)
        # only for small fan-in (~<=256 on v5e/v6e/v7x).
        fuse_gather = in_dim <= 256

    big_vmem = _vmem_capacity_bytes() >= (96 << 20)   # v5e/v6e: 128 MiB, v7x: 64 MiB
    vmem_limit = (80 << 20) if big_vmem else (48 << 20)

    if fuse_gather:
        # -------- fused path: x tile resident, gather done inside the kernel ----
        idx = jnp.pad(jnp.stack([idx0, idx1], axis=0), ((0, 6), (0, 0)))  # (8, out_dim)
        tb, tn = _pick_tiles(B, out_dim, tb_cap=512, tn_cap=1024)
        grid = (pl.cdiv(B, tb), pl.cdiv(out_dim, tn))   # batch outer -> x tile resident
        return pl.pallas_call(
            _logic_gather_kernel,
            out_shape=jax.ShapeDtypeStruct((B, out_dim), out_dtype),
            grid=grid,
            in_specs=[
                pl.BlockSpec((tb, in_dim), lambda i, j: (i, 0)),   # x (resident over j)
                pl.BlockSpec((8, tn), lambda i, j: (0, j)),        # idx0/idx1
                pl.BlockSpec((8, tn), lambda i, j: (0, j)),        # coefficients
            ],
            out_specs=pl.BlockSpec((tb, tn), lambda i, j: (i, j)),
            compiler_params=pltpu.CompilerParams(
                dimension_semantics=("parallel", "parallel"),
                vmem_limit_bytes=vmem_limit,
                allow_input_fusion=[True, True, True],
            ),
        )(x, idx, coeffs)

    # -------- unfused path (large fan-in): gather in XLA, elementwise kernel ----
    a = jnp.take(x, idx0, axis=1)                                        # (B, out_dim)
    b = jnp.take(x, idx1, axis=1)                                        # (B, out_dim)
    tb, tn = _pick_tiles(B, out_dim,
                         tb_cap=1024 if big_vmem else 512, tn_cap=2048)
    grid = (pl.cdiv(out_dim, tn), pl.cdiv(B, tb))   # out_dim outer -> coeff tile stationary
    return pl.pallas_call(
        _logic_affine_kernel,
        out_shape=jax.ShapeDtypeStruct((B, out_dim), out_dtype),
        grid=grid,
        in_specs=[
            pl.BlockSpec((tb, tn), lambda j, i: (i, j)),   # a
            pl.BlockSpec((tb, tn), lambda j, i: (i, j)),   # b
            pl.BlockSpec((8, tn), lambda j, i: (0, j)),    # coefficients (stationary over i)
        ],
        out_specs=pl.BlockSpec((tb, tn), lambda j, i: (i, j)),
        compiler_params=pltpu.CompilerParams(
            dimension_semantics=("parallel", "parallel"),
            vmem_limit_bytes=vmem_limit,
            allow_input_fusion=[True, True, True],
        ),
    )(a, b, coeffs)


def _reference_forward(x, weights, idx0, idx1, training=True):
    """Pure-JAX reference matching the PyTorch semantics (16-term sum)."""
    a = x[:, idx0]
    b = x[:, idx1]
    ab = a * b
    one = jnp.ones_like(a)
    ops = [
        jnp.zeros_like(a), ab, a - ab, a, b - ab, b,
        a + b - 2 * ab, a + b - ab, one - (a + b - ab),
        one - (a + b - 2 * ab), one - b, one - b + ab,
        one - a, one - a + ab, one - ab, one,
    ]
    if training:
        ind = jax.nn.softmax(weights, axis=-1)
    else:
        ind = jax.nn.one_hot(jnp.argmax(weights, axis=-1), 16, dtype=weights.dtype)
    res = jnp.zeros_like(a)
    for i in range(16):
        res = res + ind[:, i][None, :] * ops[i]
    return res


if __name__ == "__main__":
    key = jax.random.PRNGKey(0)
    B, in_dim, out_dim = 8, 64, 256
    kx, kw, ki0, ki1, kx2, kw2, ki2, ki3 = jax.random.split(key, 8)

    x = jax.random.uniform(kx, (B, in_dim), dtype=jnp.float32)
    weights = jax.random.normal(kw, (out_dim, 16), dtype=jnp.float32)
    idx0 = jax.random.randint(ki0, (out_dim,), 0, in_dim, dtype=jnp.int32)
    idx1 = jax.random.randint(ki1, (out_dim,), 0, in_dim, dtype=jnp.int32)

    ref = _reference_forward(x, weights, idx0, idx1, training=True)

    # 1) fused path (in-kernel one-hot MXU gather), training mode.
    #    Selection is exact under a >=3-pass f32 MXU decomposition; tolerance
    #    leaves slack for implementation-defined f32 matmul pass structure.
    out_fused = jax.block_until_ready(
        logic_layer_forward(x, weights, idx0, idx1, training=True, fuse_gather=True))
    assert out_fused.shape == (B, out_dim)
    assert jnp.allclose(out_fused, ref, atol=1e-2, rtol=1e-2), "fused path mismatch"

    # 2) unfused path (wrapper gather, pure-VPU kernel) -> tight tolerance.
    out_unfused = jax.block_until_ready(
        logic_layer_forward(x, weights, idx0, idx1, training=True, fuse_gather=False))
    assert jnp.allclose(out_unfused, ref, atol=1e-5, rtol=1e-5), "unfused path mismatch"

    # 3) eval mode (hard one-hot op selection).
    out_eval = jax.block_until_ready(
        logic_layer_forward(x, weights, idx0, idx1, training=False))
    ref_eval = _reference_forward(x, weights, idx0, idx1, training=False)
    assert jnp.allclose(out_eval, ref_eval, atol=1e-2, rtol=1e-2), "eval-mode mismatch"

    # 4) unaligned shapes -> ragged edge blocks (no wrapper padding / slicing).
    B2, out_dim2 = 5, 200
    x2 = jax.random.uniform(kx2, (B2, in_dim), dtype=jnp.float32)
    w2 = jax.random.normal(kw2, (out_dim2, 16), dtype=jnp.float32)
    i0 = jax.random.randint(ki2, (out_dim2,), 0, in_dim, dtype=jnp.int32)
    i1 = jax.random.randint(ki3, (out_dim2,), 0, in_dim, dtype=jnp.int32)
    out2 = jax.block_until_ready(logic_layer_forward(x2, w2, i0, i1, training=True))
    ref2 = _reference_forward(x2, w2, i0, i1, training=True)
    assert out2.shape == (B2, out_dim2)
    assert jnp.allclose(out2, ref2, atol=1e-2, rtol=1e-2), "ragged-shape mismatch"

    # 5) bf16 I/O smoke test (halves HBM bytes; compute stays f32 in-kernel).
    x_bf16 = x.astype(jnp.bfloat16)
    out_bf16 = jax.block_until_ready(
        logic_layer_forward(x_bf16, weights, idx0, idx1, training=True))
    ref_bf16 = _reference_forward(x_bf16.astype(jnp.float32), weights, idx0, idx1,
                                  training=True)
    assert out_bf16.dtype == jnp.bfloat16
    assert jnp.allclose(out_bf16.astype(jnp.float32), ref_bf16,
                        atol=2e-2, rtol=2e-2), "bf16 I/O mismatch"

    print("KERNEL_OK")
</pallas_src>

<mosaic_0001>
module attributes {stable_mosaic.version = 11 : i64} {
  func.func @_logic_gather_kernel(%arg0: i32, %arg1: i32, %arg2: memref<8x64xf32, #tpu.memory_space<vmem>>, %arg3: memref<8x128xi32, #tpu.memory_space<vmem>>, %arg4: memref<8x128xf32, #tpu.memory_space<vmem>>, %arg5: memref<8x128xf32, #tpu.memory_space<vmem>>) attributes {dimension_semantics = [#tpu.dimension_semantics<parallel>, #tpu.dimension_semantics<parallel>], iteration_bounds = array<i64: 1, 2>, scalar_prefetch = 0 : i64, scratch_operands = 0 : i64, tpu.core_type = #tpu.core_type<tc>, window_params = [{transform_indices = @transform_0, window_bounds = array<i64: 8, 64>}, {transform_indices = @transform_1, window_bounds = array<i64: 8, 128>}, {transform_indices = @transform_2, window_bounds = array<i64: 8, 128>}, {transform_indices = @transform_3, window_bounds = array<i64: 8, 128>}]} {
    %c0 = arith.constant 0 : index
    %c0_0 = arith.constant 0 : index
    %0 = vector.load %arg2[%c0, %c0_0] : memref<8x64xf32, #tpu.memory_space<vmem>>, vector<8x64xf32>
    %1 = tpu.iota {dimensions = array<i32: 0>} : vector<64x128xi32>
    %c0_1 = arith.constant 0 : index
    %c0_2 = arith.constant 0 : index
    %2 = vector.load %arg3[%c0_1, %c0_2] : memref<8x128xi32, #tpu.memory_space<vmem>>, vector<1x128xi32>
    %3 = vector.broadcast %2 : vector<1x128xi32> to vector<64x128xi32>
    %4 = arith.cmpi eq, %1, %3 : vector<64x128xi32>
    %cst = arith.constant 1.000000e+00 : f32
    %cst_3 = arith.constant 0.000000e+00 : f32
    %5 = vector.broadcast %cst : f32 to vector<64x128xf32>
    %6 = vector.broadcast %cst_3 : f32 to vector<64x128xf32>
    %7 = arith.select %4, %5, %6 : vector<64x128xi1>, vector<64x128xf32>
    %c1 = arith.constant 1 : index
    %c0_4 = arith.constant 0 : index
    %8 = vector.load %arg3[%c1, %c0_4] : memref<8x128xi32, #tpu.memory_space<vmem>>, vector<1x128xi32>
    %9 = vector.broadcast %8 : vector<1x128xi32> to vector<64x128xi32>
    %10 = arith.cmpi eq, %1, %9 : vector<64x128xi32>
    %cst_5 = arith.constant 1.000000e+00 : f32
    %cst_6 = arith.constant 0.000000e+00 : f32
    %11 = vector.broadcast %cst_5 : f32 to vector<64x128xf32>
    %12 = vector.broadcast %cst_6 : f32 to vector<64x128xf32>
    %13 = arith.select %10, %11, %12 : vector<64x128xi1>, vector<64x128xf32>
    %cst_7 = arith.constant dense<0.000000e+00> : vector<8x128xf32>
    %14 = tpu.matmul %0, %7, %cst_7 {dimension_numbers = #tpu.dot_dimension_numbers<[1], [0], [0], [1], [0, 0, 1, 1], [], []>} : vector<8x64xf32>, vector<64x128xf32>, vector<8x128xf32> -> vector<8x128xf32>
    %cst_8 = arith.constant dense<0.000000e+00> : vector<8x128xf32>
    %15 = tpu.matmul %0, %13, %cst_8 {dimension_numbers = #tpu.dot_dimension_numbers<[1], [0], [0], [1], [0, 0, 1, 1], [], []>} : vector<8x64xf32>, vector<64x128xf32>, vector<8x128xf32> -> vector<8x128xf32>
    %c0_9 = arith.constant 0 : index
    %c0_10 = arith.constant 0 : index
    %16 = vector.load %arg4[%c0_9, %c0_10] : memref<8x128xf32, #tpu.memory_space<vmem>>, vector<1x128xf32>
    %c1_11 = arith.constant 1 : index
    %c0_12 = arith.constant 0 : index
    %17 = vector.load %arg4[%c1_11, %c0_12] : memref<8x128xf32, #tpu.memory_space<vmem>>, vector<1x128xf32>
    %c2 = arith.constant 2 : index
    %c0_13 = arith.constant 0 : index
    %18 = vector.load %arg4[%c2, %c0_13] : memref<8x128xf32, #tpu.memory_space<vmem>>, vector<1x128xf32>
    %c3 = arith.constant 3 : index
    %c0_14 = arith.constant 0 : index
    %19 = vector.load %arg4[%c3, %c0_14] : memref<8x128xf32, #tpu.memory_space<vmem>>, vector<1x128xf32>
    %20 = vector.broadcast %18 : vector<1x128xf32> to vector<8x128xf32>
    %21 = arith.mulf %15, %20 : vector<8x128xf32>
    %22 = vector.broadcast %16 : vector<1x128xf32> to vector<8x128xf32>
    %23 = arith.addf %22, %21 : vector<8x128xf32>
    %24 = vector.broadcast %19 : vector<1x128xf32> to vector<8x128xf32>
    %25 = arith.mulf %15, %24 : vector<8x128xf32>
    %26 = vector.broadcast %17 : vector<1x128xf32> to vector<8x128xf32>
    %27 = arith.addf %26, %25 : vector<8x128xf32>
    %28 = arith.mulf %14, %27 : vector<8x128xf32>
    %29 = arith.addf %23, %28 : vector<8x128xf32>
    %c0_15 = arith.constant 0 : index
    %c0_16 = arith.constant 0 : index
    %30 = vector.load %arg5[%c0_15, %c0_16] : memref<8x128xf32, #tpu.memory_space<vmem>>, vector<8x128xf32>
    tpu.vector_store %arg5[%c0_15, %c0_16], %29 {strides = array<i32>} : memref<8x128xf32, #tpu.memory_space<vmem>>, vector<8x128xf32>,
    return
  }
  func.func @transform_0(%arg0: i32, %arg1: i32) -> (i32, i32) {
    %c0_i32 = arith.constant 0 : i32
    %c0_i32_0 = arith.constant 0 : i32
    return %arg0, %c0_i32 : i32, i32
  }
  func.func @transform_1(%arg0: i32, %arg1: i32) -> (i32, i32) {
    %c0_i32 = arith.constant 0 : i32
    %c0_i32_0 = arith.constant 0 : i32
    return %c0_i32, %arg1 : i32, i32
  }
  func.func @transform_2(%arg0: i32, %arg1: i32) -> (i32, i32) {
    %c0_i32 = arith.constant 0 : i32
    %c0_i32_0 = arith.constant 0 : i32
    return %c0_i32, %arg1 : i32, i32
  }
  func.func @transform_3(%arg0: i32, %arg1: i32) -> (i32, i32) {
    %c0_i32 = arith.constant 0 : i32
    return %arg0, %arg1 : i32, i32
  }
}

</mosaic_0001>

<llo_original>
// kernel: tpu_custom_call.1
$region0: #{tpu_custom_call.1}
  #allocation0 [shape = 'u32[]', space=smem, size = 0x4, offset = 0x4, fixed_abs, tag = 'smem constant byte address 0x4 - core index']
  #allocation1 [shape = 'u32[72,128]{1,0:T(1,128)}', space=vmem, size = 0x9000, scoped, tag = 'internal scratch']
  %s0 = inlined_call_operand.hbm [shape: f32[8,64], index: 0, kind: input, shape index: {}]
  %s1 = inlined_call_operand.hbm [shape: s32[8,256], index: 1, kind: input, shape index: {}]
  %s2 = inlined_call_operand.hbm [shape: f32[8,256], index: 2, kind: input, shape index: {}]
  %s3 = inlined_call_operand.hbm [shape: f32[8,256], index: 3, kind: output, shape index: {}]
  %s4 = sld [smem:[#allocation0]]
  $region57: #{tpu_custom_call.1} parent=0
    _
  %s6 = ssub.s32 1, %s4
  %s7 = scalar_select 0, %s6, %s4
  $region1: #{tpu_custom_call.1} parent=0
    #allocation2 [shape = 'u8[4096]{0}', space=vmem, size = 0x1000, scoped, tag = 'input window, operand 0, single buffered']
    #allocation3 [shape = 's32[2]{0}', space=sflag, size = 0x8, scoped, tag = 'scoped memory for tpu_custom_call.1']
    #allocation4 [shape = 's32[2]{0}', space=sflag, size = 0x8, scoped, tag = 'scoped memory for tpu_custom_call.1']
    #allocation5 [shape = 'u8[8192]{0}', space=vmem, size = 0x2000, scoped, tag = 'input window, operand 1']
    #allocation6 [shape = 's32[2]{0}', space=sflag, size = 0x8, scoped, tag = 'scoped memory for tpu_custom_call.1']
    #allocation7 [shape = 'u8[8192]{0}', space=vmem, size = 0x2000, scoped, tag = 'input window, operand 2']
    #allocation8 [shape = 'u8[8192]{0}', space=vmem, size = 0x2000, scoped, tag = 'output window, operand 0']
    %8 = vsyncpa [#allocation3], 0
    %9 = vsyncpa [#allocation6], 0
    %s10 = scalar_lea.sflag [#allocation6], 1
    %11 = vsyncpa %s10, 0
    %12 = vsyncpa [#allocation4], 0
    %s13 = scalar_lea.sflag [#allocation4], 1
    %14 = vsyncpa %s13, 0
    loop: start=0, step=1, limit=4
    $region2: #{tpu_custom_call.1} parent=1 // loop_pre_header
      _
    $region3: #{tpu_custom_call.1} parent=1 // loop_header
      %s16 = sphi 0, %s20
      %p17 = scmp.ge.s32.totalorder %s16, 4
      %s23 = sphi 0, %s35
      %s24 = sphi 0, %s31
      %s25 = sphi 0, %s23
      %s26 = sphi 0, %s24
      %s27 = sphi 0, %s25
      %s28 = sphi 0, %s26
      %s38 = sphi 0, %s40
      %s41 = sphi 0, %s38
      %s42 = sphi 0, %s41
      %s58 = sphi 0, %s42
      %s64 = sphi 0, %s66
      %s67 = sphi 0, %s64
      %s68 = sphi 0, %s67
      %s84 = sphi 0, %s68
      %s90 = sphi 0, %s92
      %s93 = sphi 0, %s90
      %s94 = sphi 0, %s93
      %s110 = sphi 0, %s94
      %s118 = sphi 0, %s120
      %s121 = sphi 0, %s118
      %s122 = sphi 0, %s121
      %s138 = sphi 0, %s122
    $region4: #{tpu_custom_call.1} parent=1 // loop_header_branch
      %19 = sbr.rel (%p17) target = $region8
    $region5: #{tpu_custom_call.1} parent=1 // loop_body
      %s21 = ssub.s32 %s16, 1
      %s22 = ssub.s32 %s16, 2
      %s29 = sadd.s32 1, %s24
      %p30 = scmp.ge.s32.totalorder %s29, 2
      %s31 = scalar_select %p30, 0, %s29
      %s32 = sadd.s32 1, %s23
      %s33 = scalar_select %p30, %s32, %s23
      %p34 = scmp.ge.s32.totalorder %s33, 1
      %s35 = scalar_select %p34, 0, %s33
      %s36 = ssub.s32 %s23, %s35
      %p37 = scmp.eq.s32.totalorder %s36, 0
      %s39 = sadd.s32 %s38, 1
      %s40 = scalar_select %p37, %s38, %s39
      %p43 = pneg %p37
      %p44 = scmp.eq.s32.totalorder %s16, 1
      %p45 = por %p43, %p44
      %p46 = scmp.ne.s32.totalorder %s38, %s41
      %p47 = scmp.eq.s32.totalorder %s16, 0
      %p48 = por %p46, %p47
      %p49 = scmp.ne.s32.totalorder %s38, %s41
      %p50 = scmp.eq.s32.totalorder %s21, 1
      %p51 = por %p49, %p50
      %p52 = scmp.ne.s32.totalorder %s41, %s42
      %p53 = scmp.eq.s32.totalorder %s21, 0
      %p54 = por %p52, %p53
      %p55 = scmp.ne.s32.totalorder %s41, %s42
      %p56 = scmp.eq.s32.totalorder %s22, 1
      %p57 = por %p55, %p56
      %p59 = scmp.ne.s32.totalorder %s42, %s58
      %p60 = scmp.eq.s32.totalorder %s22, 0
      %p61 = por %p59, %p60
      %s62 = ssub.s32 %s24, %s31
      %p63 = scmp.eq.s32.totalorder %s62, 0
      %s65 = sadd.s32 %s64, 1
      %s66 = scalar_select %p63, %s64, %s65
      %p69 = pneg %p63
      %p70 = scmp.eq.s32.totalorder %s16, 1
      %p71 = por %p69, %p70
      %p72 = scmp.ne.s32.totalorder %s64, %s67
      %p73 = scmp.eq.s32.totalorder %s16, 0
      %p74 = por %p72, %p73
      %p75 = scmp.ne.s32.totalorder %s64, %s67
      %p76 = scmp.eq.s32.totalorder %s21, 1
      %p77 = por %p75, %p76
      %p78 = scmp.ne.s32.totalorder %s67, %s68
      %p79 = scmp.eq.s32.totalorder %s21, 0
      %p80 = por %p78, %p79
      %p81 = scmp.ne.s32.totalorder %s67, %s68
      %p82 = scmp.eq.s32.totalorder %s22, 1
      %p83 = por %p81, %p82
      %p85 = scmp.ne.s32.totalorder %s68, %s84
      %p86 = scmp.eq.s32.totalorder %s22, 0
      %p87 = por %p85, %p86
      %s88 = ssub.s32 %s24, %s31
      %p89 = scmp.eq.s32.totalorder %s88, 0
      %s91 = sadd.s32 %s90, 1
      %s92 = scalar_select %p89, %s90, %s91
      %p95 = pneg %p89
      %p96 = scmp.eq.s32.totalorder %s16, 1
      %p97 = por %p95, %p96
      %p98 = scmp.ne.s32.totalorder %s90, %s93
      %p99 = scmp.eq.s32.totalorder %s16, 0
      %p100 = por %p98, %p99
      %p101 = scmp.ne.s32.totalorder %s90, %s93
      %p102 = scmp.eq.s32.totalorder %s21, 1
      %p103 = por %p101, %p102
      %p104 = scmp.ne.s32.totalorder %s93, %s94
      %p105 = scmp.eq.s32.totalorder %s21, 0
      %p106 = por %p104, %p105
      %p107 = scmp.ne.s32.totalorder %s93, %s94
      %p108 = scmp.eq.s32.totalorder %s22, 1
      %p109 = por %p107, %p108
      %p111 = scmp.ne.s32.totalorder %s94, %s110
      %p112 = scmp.eq.s32.totalorder %s22, 0
      %p113 = por %p111, %p112
      %s114 = ssub.s32 %s23, %s35
      %s115 = ssub.s32 %s24, %s31
      %s116 = sor.u32 %s114, %s115
      %p117 = scmp.eq.s32.totalorder %s116, 0
      %s119 = sadd.s32 %s118, 1
      %s120 = scalar_select %p117, %s118, %s119
      %p123 = pneg %p117
      %p124 = scmp.eq.s32.totalorder %s16, 1
      %p125 = por %p123, %p124
      %p126 = scmp.ne.s32.totalorder %s118, %s121
      %p127 = scmp.eq.s32.totalorder %s16, 0
      %p128 = por %p126, %p127
      %p129 = scmp.ne.s32.totalorder %s118, %s121
      %p130 = scmp.eq.s32.totalorder %s21, 1
      %p131 = por %p129, %p130
      %p132 = scmp.ne.s32.totalorder %s121, %s122
      %p133 = scmp.eq.s32.totalorder %s21, 0
      %p134 = por %p132, %p133
      %p135 = scmp.ne.s32.totalorder %s121, %s122
      %p136 = scmp.eq.s32.totalorder %s22, 1
      %p137 = por %p135, %p136
      %p139 = scmp.ne.s32.totalorder %s122, %s138
      %p140 = scmp.eq.s32.totalorder %s22, 0
      %p141 = por %p139, %p140
      %p142 = scmp.le.s32.totalorder 1, %s16
      %p143 = scmp.lt.s32.totalorder %s16, 3
      %p144 = pnand %p142, %p143
      %p145 = pneg %p144
      // Predicated region
      $region9: #{tpu_custom_call.1} parent=5 // pred_check
        _
      $region10: #{tpu_custom_call.1} parent=5 // pred_check_branch
        %147 = sbr.rel (%p144) target = $region12
      $region11: #{tpu_custom_call.1} parent=5 // pred_region
        %s148 = ssub.s32 %s16, 1
        // Predicated region
        $region13: #{tpu_custom_call.1} parent=11 // pred_check
          %p149 = pneg %p54
        $region14: #{tpu_custom_call.1} parent=11 // pred_check_branch
          %151 = sbr.rel (%p149) target = $region16
        $region15: #{tpu_custom_call.1} parent=11 // pred_region
          %153 = vsyncadd [#allocation3], 0
          %s154 = smul.addr %s25, 8
          %s155 = scalar_lea.hbm %s0, %s154
          %s157 = sshll.u32 %s155, 4
          %s158 = int_to_ptr.hbm [resolvable:$true] %s157
          %s159 = sshll.u32 [#allocation2], 4
          %s160 = int_to_ptr.vmem [resolvable:$true] %s159
          %162 = dma.hbm_to_vmem [thread:$0]  %s158, 128, %s160, [#allocation3]
        $region16: #{tpu_custom_call.1} parent=11 // pred_fallthru
          _
      $region12: #{tpu_custom_call.1} parent=5 // pred_fallthru
        _
      %p163 = scmp.lt.s32.totalorder %s16, 2
      // Predicated region
      $region17: #{tpu_custom_call.1} parent=5 // pred_check
        %p164 = pneg %p163
      $region18: #{tpu_custom_call.1} parent=5 // pred_check_branch
        %166 = sbr.rel (%p164) target = $region20
      $region19: #{tpu_custom_call.1} parent=5 // pred_region
        // Predicated region
        $region21: #{tpu_custom_call.1} parent=19 // pred_check
          %p167 = pneg %p74
        $region22: #{tpu_custom_call.1} parent=19 // pred_check_branch
          %169 = sbr.rel (%p167) target = $region24
        $region23: #{tpu_custom_call.1} parent=19 // pred_region
          %s170 = sand.u32 %s16, 1
          %s171 = scalar_lea.sflag [#allocation6], %s170
          %s172 = sand.u32 %s64, 1
          %s173 = smul.addr %s172, 8
          %s174 = scalar_lea.vmem [#allocation5], %s173
          %176 = vsyncadd %s171, 0
          %s177 = smul.addr %s24, 8
          %s178 = scalar_lea.hbm %s1, %s177
          %s180 = sshll.u32 %s178, 4
          %s181 = int_to_ptr.hbm [resolvable:$true] %s180
          %s182 = sshll.u32 %s174, 4
          %s183 = int_to_ptr.vmem [resolvable:$true] %s182
          %185 = dma.hbm_to_vmem [thread:$0]  %s181, 128, %s183, %s171
        $region24: #{tpu_custom_call.1} parent=19 // pred_fallthru
          _
        // Predicated region
        $region25: #{tpu_custom_call.1} parent=19 // pred_check
          %p186 = pneg %p100
        $region26: #{tpu_custom_call.1} parent=19 // pred_check_branch
          %188 = sbr.rel (%p186) target = $region28
        $region27: #{tpu_custom_call.1} parent=19 // pred_region
          %s189 = sand.u32 %s16, 1
          %s190 = scalar_lea.sflag [#allocation6], %s189
          %s191 = sand.u32 %s90, 1
          %s192 = smul.addr %s191, 8
          %s193 = scalar_lea.vmem [#allocation7], %s192
          %195 = vsyncadd %s190, 0
          %s196 = smul.addr %s24, 8
          %s197 = scalar_lea.hbm %s2, %s196
          %s199 = sshll.u32 %s197, 4
          %s200 = int_to_ptr.hbm [resolvable:$true] %s199
          %s201 = sshll.u32 %s193, 4
          %s202 = int_to_ptr.vmem [resolvable:$true] %s201
          %204 = dma.hbm_to_vmem [thread:$0]  %s200, 128, %s202, %s190
        $region28: #{tpu_custom_call.1} parent=19 // pred_fallthru
          _
      $region20: #{tpu_custom_call.1} parent=5 // pred_fallthru
        _
      %p205 = scmp.le.s32.totalorder 1, %s16
      %p206 = scmp.lt.s32.totalorder %s16, 3
      %p207 = pnand %p205, %p206
      %p208 = pneg %p207
      // Predicated region
      $region29: #{tpu_custom_call.1} parent=5 // pred_check
        _
      $region30: #{tpu_custom_call.1} parent=5 // pred_check_branch
        %210 = sbr.rel (%p207) target = $region32
      $region31: #{tpu_custom_call.1} parent=5 // pred_region
        %s211 = ssub.s32 %s16, 1
        // Predicated region
        $region33: #{tpu_custom_call.1} parent=31 // pred_check
          %p212 = pneg %p54
        $region34: #{tpu_custom_call.1} parent=31 // pred_check_branch
          %214 = sbr.rel (%p212) target = $region36
        $region35: #{tpu_custom_call.1} parent=31 // pred_region
          %216 = dma.done [#allocation3], 128
        $region36: #{tpu_custom_call.1} parent=31 // pred_fallthru
          _
        %s217 = sand.u32 %s21, 1
        %s218 = scalar_lea.sflag [#allocation6], %s217
        %s219 = sand.u32 %s67, 1
        %s220 = smul.addr %s219, 8
        %s221 = scalar_lea.vmem [#allocation5], %s220
        // Predicated region
        $region37: #{tpu_custom_call.1} parent=31 // pred_check
          %p222 = pneg %p80
        $region38: #{tpu_custom_call.1} parent=31 // pred_check_branch
          %224 = sbr.rel (%p222) target = $region40
        $region39: #{tpu_custom_call.1} parent=31 // pred_region
          %226 = dma.done %s218, 128
        $region40: #{tpu_custom_call.1} parent=31 // pred_fallthru
          _
        %s227 = sand.u32 %s21, 1
        %s228 = scalar_lea.sflag [#allocation6], %s227
        %s229 = sand.u32 %s93, 1
        %s230 = smul.addr %s229, 8
        %s231 = scalar_lea.vmem [#allocation7], %s230
        // Predicated region
        $region41: #{tpu_custom_call.1} parent=31 // pred_check
          %p232 = pneg %p106
        $region42: #{tpu_custom_call.1} parent=31 // pred_check_branch
          %234 = sbr.rel (%p232) target = $region44
        $region43: #{tpu_custom_call.1} parent=31 // pred_region
          %236 = dma.done %s228, 128
        $region44: #{tpu_custom_call.1} parent=31 // pred_fallthru
          _
        %p237 = pneg %p54
        %p238 = pneg %p51
        %s239 = sand.u32 %s21, 1
        %s240 = scalar_lea.sflag [#allocation6], %s239
        %s241 = sand.u32 %s67, 1
        %s242 = smul.addr %s241, 8
        %s243 = scalar_lea.vmem [#allocation5], %s242
        %p244 = pneg %p80
        %p245 = pneg %p77
        %s246 = sand.u32 %s21, 1
        %s247 = scalar_lea.sflag [#allocation6], %s246
        %s248 = sand.u32 %s93, 1
        %s249 = smul.addr %s248, 8
        %s250 = scalar_lea.vmem [#allocation7], %s249
        %p251 = pneg %p106
        %p252 = pneg %p103
        %p253 = pneg %p134
        %p254 = pneg %p131
        %s255 = sand.u32 %s121, 1
        %s256 = scalar_lea.sflag [#allocation4], %s255
        %s257 = sand.u32 %s121, 1
        %s258 = smul.addr %s257, 8
        %s259 = scalar_lea.vmem [#allocation8], %s258
        %v260 = vld [vmem:[#allocation2] sm:$0xff]
        %v261 = vlaneseq
        %v262 = vshrl.u32 %v261, 7
        %v263 = vadd.s32 %v262, 8
        %v264 = vadd.s32 %v262, 16
        %v265 = vadd.s32 %v262, 24
        %v266 = vadd.s32 %v262, 32
        %v267 = vadd.s32 %v262, 40
        %v268 = vadd.s32 %v262, 48
        %v269 = vadd.s32 %v262, 56
        %v270 = vld [vmem:[%s221] sm:$0x1]
        %v271 = vperm.slane %v270, 0
        %vm272 = vcmp.eq.s32.totalorder %v262, %v271
        %vm273 = vcmp.eq.s32.totalorder %v263, %v271
        %vm274 = vcmp.eq.s32.totalorder %v264, %v271
        %vm275 = vcmp.eq.s32.totalorder %v265, %v271
        %vm276 = vcmp.eq.s32.totalorder %v266, %v271
        %vm277 = vcmp.eq.s32.totalorder %v267, %v271
        %vm278 = vcmp.eq.s32.totalorder %v268, %v271
        %vm279 = vcmp.eq.s32.totalorder %v269, %v271
        %v280 = vsel %vm272, 1.0, 0.0
        %v281 = vsel %vm273, 1.0, 0.0
        %v282 = vsel %vm274, 1.0, 0.0
        %v283 = vsel %vm275, 1.0, 0.0
        %v284 = vsel %vm276, 1.0, 0.0
        %v285 = vsel %vm277, 1.0, 0.0
        %v286 = vsel %vm278, 1.0, 0.0
        %v287 = vsel %vm279, 1.0, 0.0
        %v288 = vld [vmem:[%s221 + $0x1] sm:$0x1]
        %v289 = vperm.slane %v288, 0
        %vm290 = vcmp.eq.s32.totalorder %v262, %v289
        %vm291 = vcmp.eq.s32.totalorder %v263, %v289
        %vm292 = vcmp.eq.s32.totalorder %v264, %v289
        %vm293 = vcmp.eq.s32.totalorder %v265, %v289
        %vm294 = vcmp.eq.s32.totalorder %v266, %v289
        %vm295 = vcmp.eq.s32.totalorder %v267, %v289
        %vm296 = vcmp.eq.s32.totalorder %v268, %v289
        %vm297 = vcmp.eq.s32.totalorder %v269, %v289
        %v298 = vsel %vm290, 1.0, 0.0
        %v299 = vsel %vm291, 1.0, 0.0
        %v300 = vsel %vm292, 1.0, 0.0
        %v301 = vsel %vm293, 1.0, 0.0
        %v302 = vsel %vm294, 1.0, 0.0
        %v303 = vsel %vm295, 1.0, 0.0
        %v304 = vsel %vm296, 1.0, 0.0
        %v305 = vsel %vm297, 1.0, 0.0
        %vm306 = vcmask 523264
        %v308 = vsel %vm306, %v260, 0
        %310 = vmatpush.msra.mxu0 0.0
        %311 = vmatpush.msra.mxu0 0.0
        %312 = vmatpush.msra.mxu0 0.0
        %313 = vmatpush.msra.mxu0 0.0
        %314 = vmatpush.msra.mxu0 0.0
        %315 = vmatpush.msra.mxu0 0.0
        %316 = vmatpush.msra.mxu0 0.0
        %317 = vmatpush.msra.mxu0 0.0
        %318 = vmatpush.msra.mxu0 %v287
        %319 = vmatpush.msra.mxu0 %v286
        %320 = vmatpush.msra.mxu0 %v285
        %321 = vmatpush.msra.mxu0 %v284
        %322 = vmatpush.msra.mxu0 %v283
        %323 = vmatpush.msra.mxu0 %v282
        %324 = vmatpush.msra.mxu0 %v281
        %325 = vmatpush.msra.mxu0 %v280
        %326 = vmatmul.f32.gmra.mxu0 %v308
        %v327 = vpop.f32.mrf.mxu0
        %v328 = vadd.f32 0.0, %v327
        %329 = vdwg.mxu0
        %330 = vmatpush.msra.mxu0 0.0
        %331 = vmatpush.msra.mxu0 0.0
        %332 = vmatpush.msra.mxu0 0.0
        %333 = vmatpush.msra.mxu0 0.0
        %334 = vmatpush.msra.mxu0 0.0
        %335 = vmatpush.msra.mxu0 0.0
        %336 = vmatpush.msra.mxu0 0.0
        %337 = vmatpush.msra.mxu0 0.0
        %338 = vmatpush.msra.mxu0 %v305
        %339 = vmatpush.msra.mxu0 %v304
        %340 = vmatpush.msra.mxu0 %v303
        %341 = vmatpush.msra.mxu0 %v302
        %342 = vmatpush.msra.mxu0 %v301
        %343 = vmatpush.msra.mxu0 %v300
        %344 = vmatpush.msra.mxu0 %v299
        %345 = vmatpush.msra.mxu0 %v298
        %346 = vmatmul.f32.gmra.mxu0 %v308
        %v347 = vpop.f32.mrf.mxu0
        %v348 = vadd.f32 0.0, %v347
        %349 = vdwg.mxu0
        %v350 = vld [vmem:[%s231] sm:$0x1]
        %v351 = vld [vmem:[%s231 + $0x1] sm:$0x1]
        %v352 = vld [vmem:[%s231 + $0x2] sm:$0x1]
        %v353 = vld [vmem:[%s231 + $0x3] sm:$0x1]
        %v354 = vperm.slane %v352, 0
        %v355 = vmul.f32 %v348, %v354
        %v356 = vperm.slane %v350, 0
        %v357 = vadd.f32 %v356, %v355
        %v358 = vperm.slane %v353, 0
        %v359 = vmul.f32 %v348, %v358
        %v360 = vperm.slane %v351, 0
        %v361 = vadd.f32 %v360, %v359
        %v362 = vmul.f32 %v328, %v361
        %v363 = vadd.f32 %v357, %v362
        %364 = vst [vmem:[%s259] sm:$0xff] %v363
        %s365 = sand.u32 %s121, 1
        %s366 = scalar_lea.sflag [#allocation4], %s365
        %s367 = sand.u32 %s121, 1
        %s368 = smul.addr %s367, 8
        %s369 = scalar_lea.vmem [#allocation8], %s368
        // Predicated region
        $region45: #{tpu_custom_call.1} parent=31 // pred_check
          %p370 = pneg %p131
        $region46: #{tpu_custom_call.1} parent=31 // pred_check_branch
          %372 = sbr.rel (%p370) target = $region48
        $region47: #{tpu_custom_call.1} parent=31 // pred_region
          %374 = vsyncadd %s366, 0
          %s375 = smul.addr %s25, 2
          %s376 = sadd.s32 %s26, %s375
          %s377 = smul.addr %s376, 8
          %s378 = scalar_lea.hbm %s3, %s377
          %s380 = sshll.u32 %s369, 4
          %s381 = int_to_ptr.vmem [resolvable:$true] %s380
          %s382 = sshll.u32 %s378, 4
          %s383 = int_to_ptr.hbm [resolvable:$true] %s382
          %385 = dma.vmem_to_hbm [thread:$0]  %s381, 128, %s383, %s366
        $region48: #{tpu_custom_call.1} parent=31 // pred_fallthru
          _
      $region32: #{tpu_custom_call.1} parent=5 // pred_fallthru
        _
      %p386 = scmp.le.s32.totalorder 2, %s16
      // Predicated region
      $region49: #{tpu_custom_call.1} parent=5 // pred_check
        %p387 = pneg %p386
      $region50: #{tpu_custom_call.1} parent=5 // pred_check_branch
        %389 = sbr.rel (%p387) target = $region52
      $region51: #{tpu_custom_call.1} parent=5 // pred_region
        %s390 = ssub.s32 %s16, 2
        // Predicated region
        $region53: #{tpu_custom_call.1} parent=51 // pred_check
          %p391 = pneg %p137
        $region54: #{tpu_custom_call.1} parent=51 // pred_check_branch
          %393 = sbr.rel (%p391) target = $region56
        $region55: #{tpu_custom_call.1} parent=51 // pred_region
          %s394 = sand.u32 %s122, 1
          %s395 = scalar_lea.sflag [#allocation4], %s394
          %s396 = sand.u32 %s122, 1
          %s397 = smul.addr %s396, 8
          %s398 = scalar_lea.vmem [#allocation8], %s397
          %400 = dma.done %s395, 128
        $region56: #{tpu_custom_call.1} parent=51 // pred_fallthru
          _
      $region52: #{tpu_custom_call.1} parent=5 // pred_fallthru
        _
    $region6: #{tpu_custom_call.1} parent=1 // loop_footer
      %s20 = sadd.s32 1, %s16
    $region7: #{tpu_custom_call.1} parent=1 // loop_footer_branch
      %15 = sbr.rel target = $region3
    $region8: #{tpu_custom_call.1} parent=1 // loop_exit
      _
    %401 = vsyncpa [#allocation3], 1
    %s402 = scalar_lea.sflag [#allocation3], 1
    %403 = vsyncpa %s402, 1
    %404 = vsyncpa [#allocation6], 1
    %s405 = scalar_lea.sflag [#allocation6], 1
    %406 = vsyncpa %s405, 1
    %407 = vsyncpa [#allocation4], 1
    %s408 = scalar_lea.sflag [#allocation4], 1
    %409 = vsyncpa %s408, 1

</llo_original>
